<compile_context>
chip_gen: v7x
topology: tpu7x:2x2x1
jax: 0.10.0
libtpu: 0.0.40
codegen_flags: <defaults>
</compile_context>

<pallas_src>
import functools

import jax
import jax.numpy as jnp
from jax.experimental import pallas as pl
from jax.experimental.pallas import tpu as pltpu

LANE = 128


def _round_up(x, m):
    return (x + m - 1) // m * m


def _vmem_limit_bytes():
    # v5e/v6e: 128 MiB physical VMEM, v7x: 64 MiB.  Leave ~16 MiB headroom for
    # the compiler, but do not cap further (per perf review).
    try:
        cap = int(pltpu.get_tpu_info().vmem_capacity_bytes)
    except Exception:
        cap = 64 * 1024 * 1024  # conservative (v7x) fallback
    return max(cap - 16 * 1024 * 1024, 32 * 1024 * 1024)


def _gate_from_pooled(pooled_f32, w1t_ref, b1_ref, w2_ref, b2_ref):
    """Tiny SE MLP on the pooled channel vector, kept off the MXU.

    pooled_f32: (C, 1) f32 channel means.
    w1t: (C, Cr)   b1: (1, Cr)   w2: (C, Cr)   b2: (C, 1)
    Returns sigmoid gate of shape (C, 1) in f32.
    """
    w1t = w1t_ref[...].astype(jnp.float32)
    b1 = b1_ref[...].astype(jnp.float32)
    w2 = w2_ref[...].astype(jnp.float32)
    b2 = b2_ref[...].astype(jnp.float32)
    # conv1 (1x1, C -> Cr): VPU mul + sublane reduce.
    h = jnp.sum(pooled_f32 * w1t, axis=0, keepdims=True) + b1          # (1, Cr)
    h = jnp.maximum(h, 0.0)
    # conv2 (1x1, Cr -> C): VPU mul + lane reduce.
    s = jnp.sum(h * w2, axis=1, keepdims=True) + b2                    # (C, 1)
    return jax.nn.sigmoid(s)


# ---------------------------------------------------------------------------
# Fused single-pass kernel: one batch element per grid step (2x HBM traffic).
# Block last dim equals the full (ragged) HW, so no padding/masking is needed.
# ---------------------------------------------------------------------------
def _fused_kernel(x_ref, w1t_ref, b1_ref, w2_ref, b2_ref, o_ref, *, inv_hw):
    x = x_ref[0]                                                       # (C, HW), native dtype
    pooled = jnp.sum(x.astype(jnp.float32), axis=1, keepdims=True) * inv_hw
    s = _gate_from_pooled(pooled, w1t_ref, b1_ref, w2_ref, b2_ref)     # (C, 1) f32
    o_ref[0] = (x * s.astype(x.dtype)).astype(o_ref.dtype)


# ---------------------------------------------------------------------------
# Two-pass tiled kernels (3x HBM traffic fallback for large C*H*W).
# ---------------------------------------------------------------------------
def _pool_kernel(x_ref, sums_ref, acc_ref, *, tile, hw, needs_mask):
    """Pure channel-sum reduction over HW tiles (MLP lives in plain JAX)."""
    s = pl.program_id(1)
    t = pl.program_id(2)
    tps = pl.num_programs(2)

    @pl.when(t == 0)
    def _():
        acc_ref[...] = jnp.zeros_like(acc_ref)

    xf = x_ref[0].astype(jnp.float32)                                  # (C, T)
    if needs_mask:
        # Logical (unclamped) lane offset of this tile along flattened H*W.
        # rem <= 0 for fully-overhanging tiles (index_map clamps the read),
        # 0 < rem < T only on the ragged last tile.
        rem = hw - (s * tps + t) * tile
        lane = jax.lax.broadcasted_iota(jnp.int32, xf.shape, 1)
        xf = jnp.where(lane < rem, xf, 0.0)
    acc_ref[...] += jnp.sum(xf, axis=1, keepdims=True)

    @pl.when(t == tps - 1)
    def _():
        sums_ref[0, 0] = acc_ref[...]


def _apply_kernel(x_ref, s_ref, o_ref):
    x = x_ref[0]                                                       # (C, T), native dtype
    o_ref[0] = (x * s_ref[0].astype(x.dtype)).astype(o_ref.dtype)


# ---------------------------------------------------------------------------
# Wrapper
# ---------------------------------------------------------------------------
def channel_attention(x_nchw, w1, b1, w2, b2, *, force_tiled=False,
                      tile_hint=None, donate_input=False):
    """ChannelAttention forward.

    x_nchw: (B, C, H, W)
    w1: (C//8, C) conv1 1x1 weight, b1: (C//8,)
    w2: (C, C//8) conv2 1x1 weight, b2: (C,)
    """
    B, C, H, W = x_nchw.shape
    Cr = w1.shape[0]
    HW = H * W
    itemsize = jnp.dtype(x_nchw.dtype).itemsize
    inv_hw = 1.0 / float(HW)

    vmem_limit = _vmem_limit_bytes()
    x = x_nchw.reshape(B, C, HW)          # no padding; ragged tails in-kernel
    io_alias = {0: 0} if donate_input else {}

    # ----- fused path footprint: 2x double-buffered (in + out) blocks; for
    # sub-32-bit dtypes budget one f32 temp in case the cast-for-reduction
    # materializes; weights are noise. -----
    fused_bytes = 4 * C * HW * itemsize
    if itemsize < 4:
        fused_bytes += 4 * C * HW
    fused_bytes += 3 * 4 * C * Cr
    use_fused = (not force_tiled) and fused_bytes <= int(vmem_limit * 0.85)

    if use_fused:
        # Lane-friendly parameter layouts for the VPU-only 1x1 convs.
        w1t = jnp.asarray(w1).T.reshape(C, Cr)
        b1r = jnp.asarray(b1).reshape(1, Cr)
        w2m = jnp.asarray(w2).reshape(C, Cr)
        b2c = jnp.asarray(b2).reshape(C, 1)
        kernel = functools.partial(_fused_kernel, inv_hw=inv_hw)
        out = pl.pallas_call(
            kernel,
            out_shape=jax.ShapeDtypeStruct((B, C, HW), x.dtype),
            grid_spec=pltpu.PrefetchScalarGridSpec(
                num_scalar_prefetch=0,
                grid=(B,),
                in_specs=[
                    pl.BlockSpec((1, C, HW), lambda b: (b, 0, 0)),
                    pl.BlockSpec((C, Cr), lambda b: (0, 0)),
                    pl.BlockSpec((1, Cr), lambda b: (0, 0)),
                    pl.BlockSpec((C, Cr), lambda b: (0, 0)),
                    pl.BlockSpec((C, 1), lambda b: (0, 0)),
                ],
                out_specs=pl.BlockSpec((1, C, HW), lambda b: (b, 0, 0)),
            ),
            compiler_params=pltpu.CompilerParams(
                dimension_semantics=("parallel",),
                vmem_limit_bytes=vmem_limit,
            ),
            cost_estimate=pl.CostEstimate(
                flops=2 * B * C * HW + 4 * B * C * Cr,
                transcendentals=B * C,
                bytes_accessed=2 * B * C * HW * itemsize,
            ),
            input_output_aliases=io_alias,
        )(x, w1t, b1r, w2m, b2c)
        return out.reshape(B, C, H, W)

    # ----- two-pass, HW-tiled path -----
    # Per-block byte target ~vmem/16 clamped to [2, 8] MiB (~3 MiB on v7x's
    # 48 MiB scoped budget, ~7-8 MiB on v5e/v6e).
    blk_target = min(max(vmem_limit // 16, 2 * 1024 * 1024), 8 * 1024 * 1024)

    def choose_tile(target_bytes):
        if tile_hint is not None:
            t = max(LANE, _round_up(int(tile_hint), LANE))
        else:
            t = max(LANE, (target_bytes // (C * itemsize)) // LANE * LANE)
        # A full-HW block is always layout-legal, and avoids masking entirely.
        return HW if t >= HW else t

    t_apply = choose_tile(blk_target)
    # Pass 1 only streams the input (its output is (C,1) per batch), so it
    # can afford roughly twice the apply-pass tile.
    t_pool = choose_tile(2 * blk_target)

    # --- Pass 1: global-average pool over HW (pure reduction kernel). ---
    n_pool = pl.cdiv(HW, t_pool)
    # Megacore: for B == 1, split the HW reduction into 2 parallel super-chunks
    # so both TensorCores (v7x) get work; partials are summed in JAX.
    ns = 2 if (B == 1 and n_pool >= 2) else 1
    tps = pl.cdiv(n_pool, ns)
    max_idx = n_pool - 1
    needs_mask = (HW % t_pool != 0) or (ns * tps != n_pool)

    pool_kernel = functools.partial(_pool_kernel, tile=t_pool, hw=HW,
                                    needs_mask=needs_mask)
    sums = pl.pallas_call(
        pool_kernel,
        out_shape=jax.ShapeDtypeStruct((B, ns, C, 1), jnp.float32),
        grid_spec=pltpu.PrefetchScalarGridSpec(
            num_scalar_prefetch=0,
            grid=(B, ns, tps),
            in_specs=[
                pl.BlockSpec(
                    (1, C, t_pool),
                    lambda b, s, t: (b, 0, jnp.minimum(s * tps + t, max_idx))),
            ],
            out_specs=pl.BlockSpec((1, 1, C, 1), lambda b, s, t: (b, s, 0, 0)),
            scratch_shapes=[pltpu.VMEM((C, 1), jnp.float32)],
        ),
        compiler_params=pltpu.CompilerParams(
            dimension_semantics=("parallel", "parallel", "arbitrary"),
            vmem_limit_bytes=vmem_limit,
        ),
        cost_estimate=pl.CostEstimate(
            flops=B * C * HW,
            transcendentals=0,
            bytes_accessed=B * C * HW * itemsize + 4 * B * ns * C,
        ),
    )(x)

    # --- SE MLP + sigmoid on the pooled (B, C) vector: tiny, plain JAX. ---
    pooled = jnp.sum(sums, axis=1)[..., 0] * inv_hw                    # (B, C) f32
    w1f = jnp.asarray(w1, jnp.float32)
    b1f = jnp.asarray(b1, jnp.float32)
    w2f = jnp.asarray(w2, jnp.float32)
    b2f = jnp.asarray(b2, jnp.float32)
    h = jnp.maximum(pooled @ w1f.T + b1f, 0.0)                         # (B, Cr)
    gate = jax.nn.sigmoid(h @ w2f.T + b2f)                            # (B, C)
    scale = gate[:, :, None]                                          # (B, C, 1) f32

    # --- Pass 2: elementwise gate apply, fully parallel over (B, HW tiles).
    # Ragged edge blocks: input over-read is harmless, store is auto-masked.
    n_apply = pl.cdiv(HW, t_apply)
    out = pl.pallas_call(
        _apply_kernel,
        out_shape=jax.ShapeDtypeStruct((B, C, HW), x.dtype),
        grid_spec=pltpu.PrefetchScalarGridSpec(
            num_scalar_prefetch=0,
            grid=(B, n_apply),
            in_specs=[
                pl.BlockSpec((1, C, t_apply), lambda b, t: (b, 0, t)),
                pl.BlockSpec((1, C, 1), lambda b, t: (b, 0, 0)),
            ],
            out_specs=pl.BlockSpec((1, C, t_apply), lambda b, t: (b, 0, t)),
        ),
        compiler_params=pltpu.CompilerParams(
            dimension_semantics=("parallel", "parallel"),
            vmem_limit_bytes=vmem_limit,
        ),
        cost_estimate=pl.CostEstimate(
            flops=B * C * HW,
            transcendentals=0,
            bytes_accessed=2 * B * C * HW * itemsize,
        ),
        input_output_aliases=io_alias,
    )(x, scale)

    return out.reshape(B, C, H, W)


def reference(x_nchw, w1, b1, w2, b2):
    # Plain-JAX reference mirroring the PyTorch forward.
    pooled = jnp.mean(x_nchw, axis=(2, 3), keepdims=True)              # (B, C, 1, 1)
    h = jnp.einsum("rc,bcij->brij", w1, pooled) + b1[None, :, None, None]
    h = jax.nn.relu(h)
    s = jnp.einsum("cr,brij->bcij", w2, h) + b2[None, :, None, None]
    s = jax.nn.sigmoid(s)
    return x_nchw * s


if __name__ == "__main__":
    key = jax.random.PRNGKey(0)
    kx, k1, k2, k3, k4, kx2 = jax.random.split(key, 6)

    # Case 1/2: B=2, C=16, 16x16 (HW multiple of 128).
    B, C, H, W = 2, 16, 16, 16          # channel must be >= 8 so that C//8 >= 1
    Cr = C // 8
    x = jax.random.normal(kx, (B, C, H, W), dtype=jnp.float32)
    w1 = jax.random.normal(k1, (Cr, C), dtype=jnp.float32) * (1.0 / jnp.sqrt(C))
    b1 = jax.random.normal(k2, (Cr,), dtype=jnp.float32) * 0.1
    w2 = jax.random.normal(k3, (C, Cr), dtype=jnp.float32) * (1.0 / jnp.sqrt(Cr))
    b2 = jax.random.normal(k4, (C,), dtype=jnp.float32) * 0.1

    ref = reference(x, w1, b1, w2, b2)

    # Path 1: fused single pass (auto-selected at this footprint).
    out_fused = jax.block_until_ready(channel_attention(x, w1, b1, w2, b2))
    assert out_fused.shape == (B, C, H, W)
    assert jnp.allclose(out_fused, ref, atol=1e-5, rtol=1e-5), "fused mismatch"

    # Path 2: two-pass HW-tiled path (what large C*H*W inputs select).
    out_tiled = jax.block_until_ready(
        channel_attention(x, w1, b1, w2, b2, force_tiled=True, tile_hint=128))
    assert out_tiled.shape == (B, C, H, W)
    assert jnp.allclose(out_tiled, ref, atol=1e-5, rtol=1e-5), "tiled mismatch"

    # Case 3: ragged spatial (14x14) + B=1: exercises the unpadded fused path,
    # the in-kernel ragged-tail mask, and the 2-super-chunk pooling split.
    B2, H2, W2 = 1, 14, 14
    x2 = jax.random.normal(kx2, (B2, C, H2, W2), dtype=jnp.float32)
    ref2 = reference(x2, w1, b1, w2, b2)

    out_fused2 = jax.block_until_ready(channel_attention(x2, w1, b1, w2, b2))
    assert out_fused2.shape == (B2, C, H2, W2)
    assert jnp.allclose(out_fused2, ref2, atol=1e-5, rtol=1e-5), "ragged fused mismatch"

    out_tiled2 = jax.block_until_ready(
        channel_attention(x2, w1, b1, w2, b2, force_tiled=True, tile_hint=128))
    assert out_tiled2.shape == (B2, C, H2, W2)
    assert jnp.allclose(out_tiled2, ref2, atol=1e-5, rtol=1e-5), "ragged tiled mismatch"

    print("KERNEL_OK")
</pallas_src>

<mosaic_0001>
module attributes {stable_mosaic.version = 11 : i64} {
  func.func @_fused_kernel(%arg0: i32, %arg1: memref<1x16x256xf32, #tpu.memory_space<vmem>>, %arg2: memref<16x2xf32, #tpu.memory_space<vmem>>, %arg3: memref<1x2xf32, #tpu.memory_space<vmem>>, %arg4: memref<16x2xf32, #tpu.memory_space<vmem>>, %arg5: memref<16x1xf32, #tpu.memory_space<vmem>>, %arg6: memref<1x16x256xf32, #tpu.memory_space<vmem>>) attributes {dimension_semantics = [#tpu.dimension_semantics<parallel>], iteration_bounds = array<i64: 2>, scalar_prefetch = 0 : i64, scratch_operands = 0 : i64, tpu.core_type = #tpu.core_type<tc>, window_params = [{transform_indices = @transform_0, window_bounds = array<i64: 1, 16, 256>}, {pipeline_mode = #tpu.pipeline_mode<synchronous>, transform_indices = @transform_1, window_bounds = array<i64: 16, 2>}, {pipeline_mode = #tpu.pipeline_mode<synchronous>, transform_indices = @transform_2, window_bounds = array<i64: 1, 2>}, {pipeline_mode = #tpu.pipeline_mode<synchronous>, transform_indices = @transform_3, window_bounds = array<i64: 16, 2>}, {pipeline_mode = #tpu.pipeline_mode<synchronous>, transform_indices = @transform_4, window_bounds = array<i64: 16, 1>}, {transform_indices = @transform_5, window_bounds = array<i64: 1, 16, 256>}]} {
    %c0 = arith.constant 0 : index
    %c0_0 = arith.constant 0 : index
    %c0_1 = arith.constant 0 : index
    %0 = vector.load %arg1[%c0, %c0_0, %c0_1] : memref<1x16x256xf32, #tpu.memory_space<vmem>>, vector<1x16x256xf32>
    %1 = vector.shape_cast %0 : vector<1x16x256xf32> to vector<16x256xf32>
    %cst = arith.constant dense<0.000000e+00> : vector<16xf32>
    %2 = vector.multi_reduction <add>, %1, %cst [1] : vector<16x256xf32> to vector<16xf32>
    %3 = vector.shape_cast %2 : vector<16xf32> to vector<16x1xf32>
    %cst_2 = arith.constant 3.906250e-03 : f32
    %4 = vector.broadcast %cst_2 : f32 to vector<16x1xf32>
    %5 = arith.mulf %3, %4 : vector<16x1xf32>
    %c0_3 = arith.constant 0 : index
    %c0_4 = arith.constant 0 : index
    %6 = vector.load %arg2[%c0_3, %c0_4] : memref<16x2xf32, #tpu.memory_space<vmem>>, vector<16x2xf32>
    %c0_5 = arith.constant 0 : index
    %c0_6 = arith.constant 0 : index
    %7 = vector.load %arg3[%c0_5, %c0_6] : memref<1x2xf32, #tpu.memory_space<vmem>>, vector<1x2xf32>
    %c0_7 = arith.constant 0 : index
    %c0_8 = arith.constant 0 : index
    %8 = vector.load %arg4[%c0_7, %c0_8] : memref<16x2xf32, #tpu.memory_space<vmem>>, vector<16x2xf32>
    %c0_9 = arith.constant 0 : index
    %c0_10 = arith.constant 0 : index
    %9 = vector.load %arg5[%c0_9, %c0_10] : memref<16x1xf32, #tpu.memory_space<vmem>>, vector<16x1xf32>
    %10 = vector.broadcast %5 : vector<16x1xf32> to vector<16x2xf32>
    %11 = arith.mulf %10, %6 : vector<16x2xf32>
    %cst_11 = arith.constant dense<0.000000e+00> : vector<2xf32>
    %12 = vector.multi_reduction <add>, %11, %cst_11 [0] : vector<16x2xf32> to vector<2xf32>
    %13 = vector.shape_cast %12 : vector<2xf32> to vector<1x2xf32>
    %14 = arith.addf %13, %7 : vector<1x2xf32>
    %cst_12 = arith.constant 0.000000e+00 : f32
    %15 = vector.broadcast %cst_12 : f32 to vector<1x2xf32>
    %16 = arith.maximumf %14, %15 : vector<1x2xf32>
    %17 = vector.broadcast %16 : vector<1x2xf32> to vector<16x2xf32>
    %18 = arith.mulf %17, %8 : vector<16x2xf32>
    %cst_13 = arith.constant dense<0.000000e+00> : vector<16xf32>
    %19 = vector.multi_reduction <add>, %18, %cst_13 [1] : vector<16x2xf32> to vector<16xf32>
    %20 = vector.shape_cast %19 : vector<16xf32> to vector<16x1xf32>
    %21 = arith.addf %20, %9 : vector<16x1xf32>
    %22 = arith.negf %21 : vector<16x1xf32>
    %23 = math.exp %22 : vector<16x1xf32>
    %cst_14 = arith.constant 1.000000e+00 : f32
    %24 = vector.broadcast %cst_14 : f32 to vector<16x1xf32>
    %25 = arith.addf %24, %23 : vector<16x1xf32>
    %26 = arith.divf %24, %25 : vector<16x1xf32>
    %27 = vector.broadcast %26 : vector<16x1xf32> to vector<16x256xf32>
    %28 = arith.mulf %1, %27 : vector<16x256xf32>
    %c0_15 = arith.constant 0 : index
    %c0_16 = arith.constant 0 : index
    %c0_17 = arith.constant 0 : index
    %29 = vector.load %arg6[%c0_15, %c0_16, %c0_17] : memref<1x16x256xf32, #tpu.memory_space<vmem>>, vector<1x16x256xf32>
    %30 = vector.shape_cast %29 : vector<1x16x256xf32> to vector<16x256xf32>
    %31 = vector.shape_cast %28 : vector<16x256xf32> to vector<1x16x256xf32>
    tpu.vector_store %arg6[%c0_15, %c0_16, %c0_17], %31 {strides = array<i32>} : memref<1x16x256xf32, #tpu.memory_space<vmem>>, vector<1x16x256xf32>,
    return
  }
  func.func @transform_0(%arg0: i32) -> (i32, i32, i32) {
    %c0_i32 = arith.constant 0 : i32
    %c0_i32_0 = arith.constant 0 : i32
    %c0_i32_1 = arith.constant 0 : i32
    return %arg0, %c0_i32, %c0_i32_0 : i32, i32, i32
  }
  func.func @transform_1(%arg0: i32) -> (i32, i32) {
    %c0_i32 = arith.constant 0 : i32
    %c0_i32_0 = arith.constant 0 : i32
    %c0_i32_1 = arith.constant 0 : i32
    return %c0_i32, %c0_i32_0 : i32, i32
  }
  func.func @transform_2(%arg0: i32) -> (i32, i32) {
    %c0_i32 = arith.constant 0 : i32
    %c0_i32_0 = arith.constant 0 : i32
    %c0_i32_1 = arith.constant 0 : i32
    return %c0_i32, %c0_i32_0 : i32, i32
  }
  func.func @transform_3(%arg0: i32) -> (i32, i32) {
    %c0_i32 = arith.constant 0 : i32
    %c0_i32_0 = arith.constant 0 : i32
    %c0_i32_1 = arith.constant 0 : i32
    return %c0_i32, %c0_i32_0 : i32, i32
  }
  func.func @transform_4(%arg0: i32) -> (i32, i32) {
    %c0_i32 = arith.constant 0 : i32
    %c0_i32_0 = arith.constant 0 : i32
    %c0_i32_1 = arith.constant 0 : i32
    return %c0_i32, %c0_i32_0 : i32, i32
  }
  func.func @transform_5(%arg0: i32) -> (i32, i32, i32) {
    %c0_i32 = arith.constant 0 : i32
    %c0_i32_0 = arith.constant 0 : i32
    %c0_i32_1 = arith.constant 0 : i32
    return %arg0, %c0_i32, %c0_i32_0 : i32, i32, i32
  }
}

</mosaic_0001>

<llo_original>
// kernel: tpu_custom_call.1
$region0: #{tpu_custom_call.1}
  #allocation0 [shape = 'u32[]', space=smem, size = 0x4, offset = 0x4, fixed_abs, tag = 'smem constant byte address 0x4 - core index']
  #allocation1 [shape = 'u32[144,128]{1,0:T(1,128)}', space=vmem, size = 0x12000, scoped, tag = 'internal scratch']
  %s0 = inlined_call_operand.hbm [shape: f32[2,16,256], index: 0, kind: input, shape index: {}]
  %s1 = inlined_call_operand.vmem [shape: f32[16,2], index: 1, kind: input, shape index: {}]
  %s2 = inlined_call_operand.vmem [shape: f32[1,2], index: 2, kind: input, shape index: {}]
  %s3 = inlined_call_operand.vmem [shape: f32[16,2], index: 3, kind: input, shape index: {}]
  %s4 = inlined_call_operand.vmem [shape: f32[16,1], index: 4, kind: input, shape index: {}]
  %s5 = inlined_call_operand.hbm [shape: f32[2,16,256], index: 5, kind: output, shape index: {}]
  %s6 = sld [smem:[#allocation0]]
  $region57: #{tpu_custom_call.1} parent=0
    _
  %s8 = ssub.s32 1, %s6
  %s9 = scalar_select 0, %s8, %s6
  $region1: #{tpu_custom_call.1} parent=0
    #allocation2 [shape = 'u8[32768]{0}', space=vmem, size = 0x8000, scoped, tag = 'input window, operand 0']
    #allocation3 [shape = 's32[2]{0}', space=sflag, size = 0x8, scoped, tag = 'scoped memory for tpu_custom_call.1']
    #allocation4 [shape = 's32[2]{0}', space=sflag, size = 0x8, scoped, tag = 'scoped memory for tpu_custom_call.1']
    #allocation5 [shape = 'u8[32768]{0}', space=vmem, size = 0x8000, scoped, tag = 'output window, operand 0']
    %10 = vsyncpa [#allocation3], 0
    %s11 = scalar_lea.sflag [#allocation3], 1
    %12 = vsyncpa %s11, 0
    %13 = vsyncpa [#allocation4], 0
    %s14 = scalar_lea.sflag [#allocation4], 1
    %15 = vsyncpa %s14, 0
    loop: start=0, step=1, limit=4
    $region2: #{tpu_custom_call.1} parent=1 // loop_pre_header
      _
    $region3: #{tpu_custom_call.1} parent=1 // loop_header
      %s17 = sphi 0, %s21
      %p18 = scmp.ge.s32.totalorder %s17, 4
      %s27 = sphi 0, %s29
      %s30 = sphi 0, %s27
      %s31 = sphi 0, %s30
      %s47 = sphi 0, %s31
      %s51 = sphi 0, %s51
      %s53 = sphi 0, %s51
      %s54 = sphi 0, %s53
      %s68 = sphi 0, %s54
      %s72 = sphi 0, %s72
      %s74 = sphi 0, %s72
      %s75 = sphi 0, %s74
      %s89 = sphi 0, %s75
      %s93 = sphi 0, %s93
      %s95 = sphi 0, %s93
      %s96 = sphi 0, %s95
      %s110 = sphi 0, %s96
      %s114 = sphi 0, %s114
      %s116 = sphi 0, %s114
      %s117 = sphi 0, %s116
      %s131 = sphi 0, %s117
      %s137 = sphi 0, %s139
      %s140 = sphi 0, %s137
      %s141 = sphi 0, %s140
      %s157 = sphi 0, %s141
    $region4: #{tpu_custom_call.1} parent=1 // loop_header_branch
      %20 = sbr.rel (%p18) target = $region8
    $region5: #{tpu_custom_call.1} parent=1 // loop_body
      %s22 = ssub.s32 %s17, 1
      %s23 = ssub.s32 %s17, 2
      %s24 = sadd.s32 %s17, 1
      %s25 = ssub.s32 %s17, %s24
      %p26 = scmp.eq.s32.totalorder %s25, 0
      %s28 = sadd.s32 %s27, 1
      %s29 = scalar_select %p26, %s27, %s28
      %p32 = pneg %p26
      %p33 = scmp.eq.s32.totalorder %s17, 1
      %p34 = por %p32, %p33
      %p35 = scmp.ne.s32.totalorder %s27, %s30
      %p36 = scmp.eq.s32.totalorder %s17, 0
      %p37 = por %p35, %p36
      %p38 = scmp.ne.s32.totalorder %s27, %s30
      %p39 = scmp.eq.s32.totalorder %s22, 1
      %p40 = por %p38, %p39
      %p41 = scmp.ne.s32.totalorder %s30, %s31
      %p42 = scmp.eq.s32.totalorder %s22, 0
      %p43 = por %p41, %p42
      %p44 = scmp.ne.s32.totalorder %s30, %s31
      %p45 = scmp.eq.s32.totalorder %s23, 1
      %p46 = por %p44, %p45
      %p48 = scmp.ne.s32.totalorder %s31, %s47
      %p49 = scmp.eq.s32.totalorder %s23, 0
      %p50 = por %p48, %p49
      %s52 = sadd.s32 %s51, 1
      %p55 = scmp.eq.s32.totalorder %s17, 1
      %p56 = scmp.ne.s32.totalorder %s51, %s53
      %p57 = scmp.eq.s32.totalorder %s17, 0
      %p58 = por %p56, %p57
      %p59 = scmp.ne.s32.totalorder %s51, %s53
      %p60 = scmp.eq.s32.totalorder %s22, 1
      %p61 = por %p59, %p60
      %p62 = scmp.ne.s32.totalorder %s53, %s54
      %p63 = scmp.eq.s32.totalorder %s22, 0
      %p64 = por %p62, %p63
      %p65 = scmp.ne.s32.totalorder %s53, %s54
      %p66 = scmp.eq.s32.totalorder %s23, 1
      %p67 = por %p65, %p66
      %p69 = scmp.ne.s32.totalorder %s54, %s68
      %p70 = scmp.eq.s32.totalorder %s23, 0
      %p71 = por %p69, %p70
      %s73 = sadd.s32 %s72, 1
      %p76 = scmp.eq.s32.totalorder %s17, 1
      %p77 = scmp.ne.s32.totalorder %s72, %s74
      %p78 = scmp.eq.s32.totalorder %s17, 0
      %p79 = por %p77, %p78
      %p80 = scmp.ne.s32.totalorder %s72, %s74
      %p81 = scmp.eq.s32.totalorder %s22, 1
      %p82 = por %p80, %p81
      %p83 = scmp.ne.s32.totalorder %s74, %s75
      %p84 = scmp.eq.s32.totalorder %s22, 0
      %p85 = por %p83, %p84
      %p86 = scmp.ne.s32.totalorder %s74, %s75
      %p87 = scmp.eq.s32.totalorder %s23, 1
      %p88 = por %p86, %p87
      %p90 = scmp.ne.s32.totalorder %s75, %s89
      %p91 = scmp.eq.s32.totalorder %s23, 0
      %p92 = por %p90, %p91
      %s94 = sadd.s32 %s93, 1
      %p97 = scmp.eq.s32.totalorder %s17, 1
      %p98 = scmp.ne.s32.totalorder %s93, %s95
      %p99 = scmp.eq.s32.totalorder %s17, 0
      %p100 = por %p98, %p99
      %p101 = scmp.ne.s32.totalorder %s93, %s95
      %p102 = scmp.eq.s32.totalorder %s22, 1
      %p103 = por %p101, %p102
      %p104 = scmp.ne.s32.totalorder %s95, %s96
      %p105 = scmp.eq.s32.totalorder %s22, 0
      %p106 = por %p104, %p105
      %p107 = scmp.ne.s32.totalorder %s95, %s96
      %p108 = scmp.eq.s32.totalorder %s23, 1
      %p109 = por %p107, %p108
      %p111 = scmp.ne.s32.totalorder %s96, %s110
      %p112 = scmp.eq.s32.totalorder %s23, 0
      %p113 = por %p111, %p112
      %s115 = sadd.s32 %s114, 1
      %p118 = scmp.eq.s32.totalorder %s17, 1
      %p119 = scmp.ne.s32.totalorder %s114, %s116
      %p120 = scmp.eq.s32.totalorder %s17, 0
      %p121 = por %p119, %p120
      %p122 = scmp.ne.s32.totalorder %s114, %s116
      %p123 = scmp.eq.s32.totalorder %s22, 1
      %p124 = por %p122, %p123
      %p125 = scmp.ne.s32.totalorder %s116, %s117
      %p126 = scmp.eq.s32.totalorder %s22, 0
      %p127 = por %p125, %p126
      %p128 = scmp.ne.s32.totalorder %s116, %s117
      %p129 = scmp.eq.s32.totalorder %s23, 1
      %p130 = por %p128, %p129
      %p132 = scmp.ne.s32.totalorder %s117, %s131
      %p133 = scmp.eq.s32.totalorder %s23, 0
      %p134 = por %p132, %p133
      %s135 = ssub.s32 %s17, %s24
      %p136 = scmp.eq.s32.totalorder %s135, 0
      %s138 = sadd.s32 %s137, 1
      %s139 = scalar_select %p136, %s137, %s138
      %p142 = pneg %p136
      %p143 = scmp.eq.s32.totalorder %s17, 1
      %p144 = por %p142, %p143
      %p145 = scmp.ne.s32.totalorder %s137, %s140
      %p146 = scmp.eq.s32.totalorder %s17, 0
      %p147 = por %p145, %p146
      %p148 = scmp.ne.s32.totalorder %s137, %s140
      %p149 = scmp.eq.s32.totalorder %s22, 1
      %p150 = por %p148, %p149
      %p151 = scmp.ne.s32.totalorder %s140, %s141
      %p152 = scmp.eq.s32.totalorder %s22, 0
      %p153 = por %p151, %p152
      %p154 = scmp.ne.s32.totalorder %s140, %s141
      %p155 = scmp.eq.s32.totalorder %s23, 1
      %p156 = por %p154, %p155
      %p158 = scmp.ne.s32.totalorder %s141, %s157
      %p159 = scmp.eq.s32.totalorder %s23, 0
      %p160 = por %p158, %p159
      %p161 = scmp.le.s32.totalorder 1, %s17
      %p162 = scmp.lt.s32.totalorder %s17, 3
      %p163 = pnand %p161, %p162
      %p164 = pneg %p163
      // Predicated region
      $region9: #{tpu_custom_call.1} parent=5 // pred_check
        _
      $region10: #{tpu_custom_call.1} parent=5 // pred_check_branch
        %166 = sbr.rel (%p163) target = $region12
      $region11: #{tpu_custom_call.1} parent=5 // pred_region
        %s167 = ssub.s32 %s17, 1
        // Predicated region
        $region13: #{tpu_custom_call.1} parent=11 // pred_check
          %p168 = pneg %p64
        $region14: #{tpu_custom_call.1} parent=11 // pred_check_branch
          %170 = sbr.rel (%p168) target = $region16
        $region15: #{tpu_custom_call.1} parent=11 // pred_region
          _
        $region16: #{tpu_custom_call.1} parent=11 // pred_fallthru
          _
        // Predicated region
        $region17: #{tpu_custom_call.1} parent=11 // pred_check
          %p171 = pneg %p85
        $region18: #{tpu_custom_call.1} parent=11 // pred_check_branch
          %173 = sbr.rel (%p171) target = $region20
        $region19: #{tpu_custom_call.1} parent=11 // pred_region
          _
        $region20: #{tpu_custom_call.1} parent=11 // pred_fallthru
          _
        // Predicated region
        $region21: #{tpu_custom_call.1} parent=11 // pred_check
          %p174 = pneg %p106
        $region22: #{tpu_custom_call.1} parent=11 // pred_check_branch
          %176 = sbr.rel (%p174) target = $region24
        $region23: #{tpu_custom_call.1} parent=11 // pred_region
          _
        $region24: #{tpu_custom_call.1} parent=11 // pred_fallthru
          _
        // Predicated region
        $region25: #{tpu_custom_call.1} parent=11 // pred_check
          %p177 = pneg %p127
        $region26: #{tpu_custom_call.1} parent=11 // pred_check_branch
          %179 = sbr.rel (%p177) target = $region28
        $region27: #{tpu_custom_call.1} parent=11 // pred_region
          _
        $region28: #{tpu_custom_call.1} parent=11 // pred_fallthru
          _
      $region12: #{tpu_custom_call.1} parent=5 // pred_fallthru
        _
      %p180 = scmp.lt.s32.totalorder %s17, 2
      // Predicated region
      $region29: #{tpu_custom_call.1} parent=5 // pred_check
        %p181 = pneg %p180
      $region30: #{tpu_custom_call.1} parent=5 // pred_check_branch
        %183 = sbr.rel (%p181) target = $region32
      $region31: #{tpu_custom_call.1} parent=5 // pred_region
        // Predicated region
        $region33: #{tpu_custom_call.1} parent=31 // pred_check
          %p184 = pneg %p37
        $region34: #{tpu_custom_call.1} parent=31 // pred_check_branch
          %186 = sbr.rel (%p184) target = $region36
        $region35: #{tpu_custom_call.1} parent=31 // pred_region
          %s187 = sand.u32 %s27, 1
          %s188 = scalar_lea.sflag [#allocation3], %s187
          %s189 = sand.u32 %s27, 1
          %s190 = smul.addr %s189, 32
          %s191 = scalar_lea.vmem [#allocation2], %s190
          %s193 = ssub.s32 512, 512
          %194 = vsyncadd %s188, %s193
          %s195 = smul.addr %s17, 4
          %s196 = smul.addr %s195, 128
          %s197 = scalar_lea.hbm %s0, %s196
          %s198 = sshll.u32 %s191, 4
          %s199 = int_to_ptr.vmem [resolvable:$true] %s198
          %204 = dma.hbm_to_vmem [thread:$0]  %s197, 512, %s199, %s188, 256, 256, 16
        $region36: #{tpu_custom_call.1} parent=31 // pred_fallthru
          _
      $region32: #{tpu_custom_call.1} parent=5 // pred_fallthru
        _
      %p205 = scmp.le.s32.totalorder 1, %s17
      %p206 = scmp.lt.s32.totalorder %s17, 3
      %p207 = pnand %p205, %p206
      %p208 = pneg %p207
      // Predicated region
      $region37: #{tpu_custom_call.1} parent=5 // pred_check
        _
      $region38: #{tpu_custom_call.1} parent=5 // pred_check_branch
        %210 = sbr.rel (%p207) target = $region40
      $region39: #{tpu_custom_call.1} parent=5 // pred_region
        %s211 = ssub.s32 %s17, 1
        %s212 = sand.u32 %s30, 1
        %s213 = scalar_lea.sflag [#allocation3], %s212
        %s214 = sand.u32 %s30, 1
        %s215 = smul.addr %s214, 32
        %s216 = scalar_lea.vmem [#allocation2], %s215
        // Predicated region
        $region41: #{tpu_custom_call.1} parent=39 // pred_check
          %p217 = pneg %p43
        $region42: #{tpu_custom_call.1} parent=39 // pred_check_branch
          %219 = sbr.rel (%p217) target = $region44
        $region43: #{tpu_custom_call.1} parent=39 // pred_region
          %220 = dma.done %s213, 512
        $region44: #{tpu_custom_call.1} parent=39 // pred_fallthru
          _
        %s221 = sand.u32 %s30, 1
        %s222 = scalar_lea.sflag [#allocation3], %s221
        %s223 = sand.u32 %s30, 1
        %s224 = smul.addr %s223, 32
        %s225 = scalar_lea.vmem [#allocation2], %s224
        %p226 = pneg %p43
        %p227 = pneg %p40
        %p228 = pneg %p64
        %p229 = pneg %p61
        %p230 = pneg %p85
        %p231 = pneg %p82
        %p232 = pneg %p106
        %p233 = pneg %p103
        %p234 = pneg %p127
        %p235 = pneg %p124
        %p236 = pneg %p153
        %p237 = pneg %p150
        %s238 = sand.u32 %s140, 1
        %s239 = scalar_lea.sflag [#allocation4], %s238
        %s240 = sand.u32 %s140, 1
        %s241 = smul.addr %s240, 32
        %s242 = scalar_lea.vmem [#allocation5], %s241
        %v243 = vld [vmem:[%s216] sm:$0xff]
        %v244 = vld [vmem:[%s216 + $0x8] sm:$0xff]
        %v245 = vld [vmem:[%s216 + $0x10] sm:$0xff]
        %v246 = vld [vmem:[%s216 + $0x18] sm:$0xff]
        %v247 = vadd.f32 %v243, %v244
        %248 = vadd.xlane.f32.xlu0 %v247
        %v249 = vpop.xlane.xlu0 %248
        %v250 = vadd.f32 %v245, %v246
        %251 = vadd.xlane.f32.xlu0 %v250
        %v252 = vpop.xlane.xlu0 %251
        %v253 = vmul.f32 %v249, 0.00390625
        %v254 = vmul.f32 %v252, 0.00390625
        %v255 = vld [vmem:[%s1] sm:$0xff]
        %v256 = vld [vmem:[%s1 + $0x8] sm:$0xff]
        %v257 = vld [vmem:[%s2] sm:$0x1]
        %v258 = vld [vmem:[%s3] sm:$0xff]
        %v259 = vld [vmem:[%s3 + $0x8] sm:$0xff]
        %v260 = vld [vmem:[%s4] sm:$0xff]
        %v261 = vld [vmem:[%s4 + $0x8] sm:$0xff]
        %v262 = vmul.f32 %v253, %v255
        %v263 = vmul.f32 %v254, %v256
        %vm264 = vcmask 15360
        %v265 = vsel %vm264, %v262, 0.0
        %v266 = vsel %vm264, %v263, 0.0
        %v267 = vadd.f32 %v265, %v266
        %v268 = vrot.slane %v267, 4
        %v269 = vadd.f32 %v267, %v268
        %v270 = vrot.slane %v269, 2
        %v271 = vadd.f32 %v269, %v270
        %v272 = vrot.slane %v271, 1
        %v273 = vadd.f32 %v271, %v272
        %v274 = vadd.f32 %v273, %v257
        %v275 = vmax.f32 %v274, 0.0
        %v276 = vlaneseq
        %v277 = vshrl.u32 %v276, 7
        %v278 = vsub.s32 0, %v277
        %v279 = vrot.slane %v275, %v278
        %v280 = vmul.f32 %v279, %v258
        %v281 = vmul.f32 %v279, %v259
        %v282 = vsel %vm264, %v280, 0.0
        %283 = vadd.xlane.f32.xlu0 %v282
        %v284 = vpop.xlane.xlu0 %283
        %v285 = vsel %vm264, %v281, 0.0
        %286 = vadd.xlane.f32.xlu0 %v285
        %v287 = vpop.xlane.xlu0 %286
        %v288 = vadd.f32 %v284, %v260
        %v289 = vadd.f32 %v287, %v261
        %v290 = vxor.u32 %v288, 2147483648
        %v291 = vxor.u32 %v289, 2147483648
        %v292 = vmul.f32 %v290, 1.442695
        %v293 = vpow.pop %v292
        %v294 = vmul.f32 %v291, 1.442695
        %v295 = vpow.pop %v294
        %v296 = vadd.f32 %v293, 1.0
        %v297 = vadd.f32 %v295, 1.0
        %v298 = vrcp.pop %v296
        %v299 = vmul.f32 1.0, %v298
        %v300 = vrcp.pop %v297
        %v301 = vmul.f32 1.0, %v300
        %303 = vset.pattern.permute.xlu0 0
        %304 = vperm.xlu0 %303, %v299
        %v305 = vpop.permute.xlu0 %304
        %308 = vset.pattern.permute.xlu0 0
        %309 = vperm.xlu0 %308, %v301
        %v310 = vpop.permute.xlu0 %309
        %v312 = vmul.f32 %v243, %v305
        %v313 = vmul.f32 %v244, %v305
        %v314 = vmul.f32 %v245, %v310
        %v315 = vmul.f32 %v246, %v310
        %316 = vst [vmem:[%s242] sm:$0xff] %v312
        %317 = vst [vmem:[%s242 + $0x8] sm:$0xff] %v313
        %318 = vst [vmem:[%s242 + $0x10] sm:$0xff] %v314
        %319 = vst [vmem:[%s242 + $0x18] sm:$0xff] %v315
        %s320 = sand.u32 %s140, 1
        %s321 = scalar_lea.sflag [#allocation4], %s320
        %s322 = sand.u32 %s140, 1
        %s323 = smul.addr %s322, 32
        %s324 = scalar_lea.vmem [#allocation5], %s323
        // Predicated region
        $region45: #{tpu_custom_call.1} parent=39 // pred_check
          %p325 = pneg %p150
        $region46: #{tpu_custom_call.1} parent=39 // pred_check_branch
          %327 = sbr.rel (%p325) target = $region48
        $region47: #{tpu_custom_call.1} parent=39 // pred_region
          %s329 = ssub.s32 512, 512
          %330 = vsyncadd %s321, %s329
          %s331 = smul.addr %s22, 4
          %s332 = smul.addr %s331, 128
          %s333 = scalar_lea.hbm %s5, %s332
          %s334 = sshll.u32 %s324, 4
          %s335 = int_to_ptr.vmem [resolvable:$true] %s334
          %340 = dma.vmem_to_hbm [thread:$0]  %s335, 512, %s333, %s321, 256, 256, 16
        $region48: #{tpu_custom_call.1} parent=39 // pred_fallthru
          _
      $region40: #{tpu_custom_call.1} parent=5 // pred_fallthru
        _
      %p341 = scmp.le.s32.totalorder 2, %s17
      // Predicated region
      $region49: #{tpu_custom_call.1} parent=5 // pred_check
        %p342 = pneg %p341
      $region50: #{tpu_custom_call.1} parent=5 // pred_check_branch
        %344 = sbr.rel (%p342) target = $region52
      $region51: #{tpu_custom_call.1} parent=5 // pred_region
        %s345 = ssub.s32 %s17, 2
        // Predicated region
        $region53: #{tpu_custom_call.1} parent=51 // pred_check
          %p346 = pneg %p156
        $region54: #{tpu_custom_call.1} parent=51 // pred_check_branch
          %348 = sbr.rel (%p346) target = $region56
        $region55: #{tpu_custom_call.1} parent=51 // pred_region
          %s349 = sand.u32 %s141, 1
          %s350 = scalar_lea.sflag [#allocation4], %s349
          %s351 = sand.u32 %s141, 1
          %s352 = smul.addr %s351, 32
          %s353 = scalar_lea.vmem [#allocation5], %s352
          %354 = dma.done %s350, 512
        $region56: #{tpu_custom_call.1} parent=51 // pred_fallthru
          _
      $region52: #{tpu_custom_call.1} parent=5 // pred_fallthru
        _
    $region6: #{tpu_custom_call.1} parent=1 // loop_footer
      %s21 = sadd.s32 1, %s17
    $region7: #{tpu_custom_call.1} parent=1 // loop_footer_branch
      %16 = sbr.rel target = $region3
    $region8: #{tpu_custom_call.1} parent=1 // loop_exit
      _
    %355 = vsyncpa [#allocation3], 1
    %s356 = scalar_lea.sflag [#allocation3], 1
    %357 = vsyncpa %s356, 1
    %358 = vsyncpa [#allocation4], 1
    %s359 = scalar_lea.sflag [#allocation4], 1
    %360 = vsyncpa %s359, 1

</llo_original>
